<compile_context>
chip_gen: v6e
topology: v6e:2x2x1
jax: 0.10.0
libtpu: 0.0.40
codegen_flags: <defaults>
</compile_context>

<pallas_src>
import functools
import math

import jax
import jax.numpy as jnp
from jax import lax
from jax.experimental import pallas as pl
from jax.experimental.pallas import tpu as pltpu

_LANE = 128


def _tiling_params():
    """Pick (target f32 tile bytes, scoped-VMEM limit bytes) per TPU generation."""
    kind = ""
    try:
        kind = jax.devices()[0].device_kind.lower()
    except Exception:
        pass
    vmem_cap = 128 * 1024 * 1024
    try:
        vmem_cap = int(pltpu.get_tpu_info().vmem_capacity_bytes)
    except Exception:
        pass

    if vmem_cap <= 64 * 1024 * 1024 or "v7" in kind:
        # v7x: 64 MiB VMEM per TensorCore. Smaller tiles restore headroom for
        # double-buffers + f32 temporaries + Mosaic internal scratch; measured
        # roofline already plateaus at this tile scale.
        return 3 * 1024 * 1024 + 512 * 1024, 40 * 1024 * 1024
    if "v5e" in kind or "v5 lite" in kind or "v5lite" in kind:
        # v5e: ~820 GB/s HBM -> smaller tiles cost <3% per-step overhead and
        # reduce scoped-VMEM / spill pressure. Limit must stay above the 16 MiB
        # default scoped cap.
        return 3 * 1024 * 1024, 48 * 1024 * 1024
    # v6e (and unknown/default): 6 MiB f32 tiles, 48 MiB scoped VMEM.
    return 6 * 1024 * 1024, 48 * 1024 * 1024


def _pick_tile_rows(padded_rows: int, d_pad: int, row_multiple: int,
                    target_tile_f32_bytes: int) -> int:
    """Large, packing-friendly row tile sized for scoped VMEM with a grid-step floor."""
    # Size by the f32 compute footprint (d_pad * 4 bytes per row).
    t = target_tile_f32_bytes // max(d_pad * 4, 1)
    t = max(row_multiple, (t // row_multiple) * row_multiple)

    # Keep at least ~8 grid steps (>=4 per TensorCore on v7x) when the input is
    # large enough, so megacore sharding + double-buffer overlap stay effective
    # on mid-size inputs instead of collapsing to a 1-2 step grid.
    min_steps = 8
    if padded_rows >= min_steps * row_multiple:
        cap = max(row_multiple,
                  (padded_rows // min_steps // row_multiple) * row_multiple)
        t = min(t, cap)

    # Never let the block extend past the allocation (degenerate small inputs).
    full = max(row_multiple, (padded_rows // row_multiple) * row_multiple)
    return min(t, full)


def _layernorm_kernel(x_ref, gamma_ref, beta_ref, o_ref, *, eps: float, d_true: int):
    # x_ref:     (tile_rows, d_pad)  VMEM tile (input dtype)
    # gamma_ref: (1, d_pad)          broadcast along rows
    # beta_ref:  (1, d_pad)
    #
    # One-pass mean/var with f32 accumulation. Padded feature columns are zero
    # so they contribute nothing to the sums; divide by the true d_model.
    # NOTE: rows are fully independent — the ragged last row-block relies on
    # Pallas masking partial writes; do not add cross-row reductions here.
    inv_d = jnp.float32(1.0 / d_true)

    xf = x_ref[...].astype(jnp.float32)
    mean = jnp.sum(xf, axis=-1, keepdims=True) * inv_d
    mean_sq = jnp.sum(xf * xf, axis=-1, keepdims=True) * inv_d
    # Biased variance (torch.var(unbiased=False)); clamp tiny negative values
    # produced by the one-pass formula's rounding.
    var = jnp.maximum(mean_sq - mean * mean, 0.0)
    inv_std = lax.rsqrt(var + jnp.float32(eps))

    gamma = gamma_ref[...].astype(jnp.float32)
    beta = beta_ref[...].astype(jnp.float32)

    # Fused normalize + affine in a single output expression; re-read/upcast the
    # tile here instead of keeping a long-lived full-tile f32 copy pinned across
    # passes (matters for 16-bit inputs).
    y = (x_ref[...].astype(jnp.float32) - mean) * inv_std
    o_ref[...] = (gamma * y + beta).astype(o_ref.dtype)


def layer_norm(x, gamma, beta, *, eps: float = 1e-12, tile_rows: int | None = None):
    """LayerNorm over the last axis of x.

    x:     (..., d_model)
    gamma: (d_model,)
    beta:  (d_model,)
    """
    orig_shape = x.shape
    d_model = orig_shape[-1]
    rows = int(math.prod(orig_shape[:-1])) if len(orig_shape) > 1 else 1

    x2 = x.reshape(rows, d_model)
    gamma2 = gamma.reshape(1, d_model)
    beta2 = beta.reshape(1, d_model)

    # Lane density: pad the feature dim to a multiple of 128 so vregs and the
    # output store path are lane-dense (avoids masked vst.msk partial stores for
    # small d_model). Zero padding is transparent to the sums.
    d_pad = ((d_model + _LANE - 1) // _LANE) * _LANE
    if d_pad != d_model:
        x2 = jnp.pad(x2, ((0, 0), (0, d_pad - d_model)))
        gamma2 = jnp.pad(gamma2, ((0, 0), (0, d_pad - d_model)))
        beta2 = jnp.pad(beta2, ((0, 0), (0, d_pad - d_model)))

    itemsize = jnp.dtype(x.dtype).itemsize
    row_multiple = 16 if itemsize < 4 else 8

    # Only pad rows in the degenerate case where the whole input has fewer rows
    # than one sublane multiple; otherwise the ragged tail is a masked partial
    # boundary block (no padded HBM copy, no output row-slice round trip).
    padded_rows = rows
    if rows < row_multiple:
        padded_rows = row_multiple
        x2 = jnp.pad(x2, ((0, padded_rows - rows), (0, 0)))

    target_tile_bytes, vmem_limit_bytes = _tiling_params()
    if tile_rows is None:
        tile_rows = _pick_tile_rows(padded_rows, d_pad, row_multiple, target_tile_bytes)
    else:
        tile_rows = max(row_multiple, (int(tile_rows) // row_multiple) * row_multiple)
    # Never let a tile extend past the (padded) allocation.
    tile_rows = min(tile_rows, max(row_multiple, (padded_rows // row_multiple) * row_multiple))

    grid = (pl.cdiv(padded_rows, tile_rows),)

    # Advisory cost hint so XLA can schedule surrounding work around this
    # HBM-bound custom call.
    param_bytes = 2 * d_pad * jnp.dtype(gamma.dtype).itemsize
    cost = pl.CostEstimate(
        flops=8 * padded_rows * d_pad,
        transcendentals=padded_rows,
        bytes_accessed=2 * padded_rows * d_pad * itemsize + param_bytes,
    )

    out = pl.pallas_call(
        functools.partial(_layernorm_kernel, eps=eps, d_true=d_model),
        out_shape=jax.ShapeDtypeStruct((padded_rows, d_pad), x.dtype),
        grid_spec=pltpu.PrefetchScalarGridSpec(
            num_scalar_prefetch=0,
            grid=grid,
            in_specs=[
                pl.BlockSpec((tile_rows, d_pad), lambda i: (i, 0)),
                pl.BlockSpec((1, d_pad), lambda i: (0, 0)),
                pl.BlockSpec((1, d_pad), lambda i: (0, 0)),
            ],
            out_specs=pl.BlockSpec((tile_rows, d_pad), lambda i: (i, 0)),
        ),
        compiler_params=pltpu.CompilerParams(
            dimension_semantics=("parallel",),
            vmem_limit_bytes=vmem_limit_bytes,
        ),
        cost_estimate=cost,
    )(x2, gamma2, beta2)

    if padded_rows != rows:
        out = out[:rows]
    if d_pad != d_model:
        out = out[:, :d_model]
    return out.reshape(orig_shape)


if __name__ == "__main__":
    # Shapes implied by the module: x = (batch, seq, d_model), params of size d_model.
    batch, seq, d_model = 2, 8, 32
    key = jax.random.PRNGKey(0)
    x = jax.random.normal(key, (batch, seq, d_model), dtype=jnp.float32)

    # Deterministic parameter init matching nn.Parameter(torch.ones/zeros(d_model)).
    gamma = jnp.ones((d_model,), dtype=jnp.float32)
    beta = jnp.zeros((d_model,), dtype=jnp.float32)

    out = layer_norm(x, gamma, beta, eps=1e-12)
    out = jax.block_until_ready(out)

    # Reference check in plain JAX (same semantics as the PyTorch forward).
    mean = jnp.mean(x, axis=-1, keepdims=True)
    var = jnp.mean((x - mean) ** 2, axis=-1, keepdims=True)
    ref = gamma * ((x - mean) / jnp.sqrt(var + 1e-12)) + beta
    assert jnp.allclose(out, ref, atol=1e-5, rtol=1e-5), "mismatch vs reference"

    print("KERNEL_OK")
</pallas_src>

<mosaic_0001>
module attributes {stable_mosaic.version = 11 : i64} {
  func.func @_layernorm_kernel(%arg0: i32, %arg1: memref<16x128xf32, #tpu.memory_space<vmem>>, %arg2: memref<1x128xf32, #tpu.memory_space<vmem>>, %arg3: memref<1x128xf32, #tpu.memory_space<vmem>>, %arg4: memref<16x128xf32, #tpu.memory_space<vmem>>) attributes {dimension_semantics = [#tpu.dimension_semantics<parallel>], iteration_bounds = array<i64: 1>, scalar_prefetch = 0 : i64, scratch_operands = 0 : i64, tpu.core_type = #tpu.core_type<tc>, window_params = [{transform_indices = @transform_0, window_bounds = array<i64: 16, 128>}, {pipeline_mode = #tpu.pipeline_mode<synchronous>, transform_indices = @transform_1, window_bounds = array<i64: 1, 128>}, {pipeline_mode = #tpu.pipeline_mode<synchronous>, transform_indices = @transform_2, window_bounds = array<i64: 1, 128>}, {transform_indices = @transform_3, window_bounds = array<i64: 16, 128>}]} {
    %c0 = arith.constant 0 : index
    %c0_0 = arith.constant 0 : index
    %0 = vector.load %arg1[%c0, %c0_0] : memref<16x128xf32, #tpu.memory_space<vmem>>, vector<16x128xf32>
    %cst = arith.constant dense<0.000000e+00> : vector<16xf32>
    %1 = vector.multi_reduction <add>, %0, %cst [1] : vector<16x128xf32> to vector<16xf32>
    %2 = vector.shape_cast %1 : vector<16xf32> to vector<16x1xf32>
    %cst_1 = arith.constant 3.125000e-02 : f32
    %3 = vector.broadcast %cst_1 : f32 to vector<16x1xf32>
    %4 = arith.mulf %2, %3 : vector<16x1xf32>
    %5 = arith.mulf %0, %0 : vector<16x128xf32>
    %cst_2 = arith.constant dense<0.000000e+00> : vector<16xf32>
    %6 = vector.multi_reduction <add>, %5, %cst_2 [1] : vector<16x128xf32> to vector<16xf32>
    %7 = vector.shape_cast %6 : vector<16xf32> to vector<16x1xf32>
    %cst_3 = arith.constant 3.125000e-02 : f32
    %8 = vector.broadcast %cst_3 : f32 to vector<16x1xf32>
    %9 = arith.mulf %7, %8 : vector<16x1xf32>
    %10 = arith.mulf %4, %4 : vector<16x1xf32>
    %11 = arith.subf %9, %10 : vector<16x1xf32>
    %cst_4 = arith.constant 0.000000e+00 : f32
    %12 = vector.broadcast %cst_4 : f32 to vector<16x1xf32>
    %13 = arith.maximumf %11, %12 : vector<16x1xf32>
    %cst_5 = arith.constant 9.99999996E-13 : f32
    %14 = vector.broadcast %cst_5 : f32 to vector<16x1xf32>
    %15 = arith.addf %13, %14 : vector<16x1xf32>
    %16 = math.rsqrt %15 : vector<16x1xf32>
    %c0_6 = arith.constant 0 : index
    %c0_7 = arith.constant 0 : index
    %17 = vector.load %arg2[%c0_6, %c0_7] : memref<1x128xf32, #tpu.memory_space<vmem>>, vector<1x128xf32>
    %c0_8 = arith.constant 0 : index
    %c0_9 = arith.constant 0 : index
    %18 = vector.load %arg3[%c0_8, %c0_9] : memref<1x128xf32, #tpu.memory_space<vmem>>, vector<1x128xf32>
    %c0_10 = arith.constant 0 : index
    %c0_11 = arith.constant 0 : index
    %19 = vector.load %arg1[%c0_10, %c0_11] : memref<16x128xf32, #tpu.memory_space<vmem>>, vector<16x128xf32>
    %20 = vector.broadcast %4 : vector<16x1xf32> to vector<16x128xf32>
    %21 = arith.subf %19, %20 : vector<16x128xf32>
    %22 = vector.broadcast %16 : vector<16x1xf32> to vector<16x128xf32>
    %23 = arith.mulf %21, %22 : vector<16x128xf32>
    %24 = vector.broadcast %17 : vector<1x128xf32> to vector<16x128xf32>
    %25 = arith.mulf %24, %23 : vector<16x128xf32>
    %26 = vector.broadcast %18 : vector<1x128xf32> to vector<16x128xf32>
    %27 = arith.addf %25, %26 : vector<16x128xf32>
    %c0_12 = arith.constant 0 : index
    %c0_13 = arith.constant 0 : index
    %28 = vector.load %arg4[%c0_12, %c0_13] : memref<16x128xf32, #tpu.memory_space<vmem>>, vector<16x128xf32>
    tpu.vector_store %arg4[%c0_12, %c0_13], %27 {strides = array<i32>} : memref<16x128xf32, #tpu.memory_space<vmem>>, vector<16x128xf32>,
    return
  }
  func.func @transform_0(%arg0: i32) -> (i32, i32) {
    %c0_i32 = arith.constant 0 : i32
    %c0_i32_0 = arith.constant 0 : i32
    return %arg0, %c0_i32 : i32, i32
  }
  func.func @transform_1(%arg0: i32) -> (i32, i32) {
    %c0_i32 = arith.constant 0 : i32
    %c0_i32_0 = arith.constant 0 : i32
    %c0_i32_1 = arith.constant 0 : i32
    return %c0_i32, %c0_i32_0 : i32, i32
  }
  func.func @transform_2(%arg0: i32) -> (i32, i32) {
    %c0_i32 = arith.constant 0 : i32
    %c0_i32_0 = arith.constant 0 : i32
    %c0_i32_1 = arith.constant 0 : i32
    return %c0_i32, %c0_i32_0 : i32, i32
  }
  func.func @transform_3(%arg0: i32) -> (i32, i32) {
    %c0_i32 = arith.constant 0 : i32
    %c0_i32_0 = arith.constant 0 : i32
    return %arg0, %c0_i32 : i32, i32
  }
}

</mosaic_0001>

<llo_original>
// kernel: tpu_custom_call.1
$region0: #{tpu_custom_call.1}
  #allocation0 [shape = 'u32[]', space=smem, size = 0x4, offset = 0x4, fixed_abs, tag = 'smem constant byte address 0x4 - core index']
  #allocation1 [shape = 'u32[144,128]{1,0:T(1,128)}', space=vmem, size = 0x12000, scoped, tag = 'internal scratch']
  %s0 = inlined_call_operand.hbm [shape: f32[16,128], index: 0, kind: input, shape index: {}]
  %s1 = inlined_call_operand.vmem [shape: f32[1,128], index: 1, kind: input, shape index: {}]
  %s2 = inlined_call_operand.vmem [shape: f32[1,128], index: 2, kind: input, shape index: {}]
  %s3 = inlined_call_operand.hbm [shape: f32[16,128], index: 3, kind: output, shape index: {}]
  %s4 = sld [smem:[#allocation0]]
  $region26: #{tpu_custom_call.1} parent=0
    _
  %s6 = ssub.s32 1, %s4
  %s7 = scalar_select 0, %s6, %s4
  $region1: #{tpu_custom_call.1} parent=0
    #allocation2 [shape = 'u8[8192]{0}', space=vmem, size = 0x2000, scoped, tag = 'input window, operand 0, single buffered']
    #allocation3 [shape = 's32[1]{0}', space=sflag, size = 0x4, scoped, tag = 'scoped memory for tpu_custom_call.1']
    #allocation4 [shape = 's32[1]{0}', space=sflag, size = 0x4, scoped, tag = 'scoped memory for tpu_custom_call.1']
    #allocation5 [shape = 'u8[8192]{0}', space=vmem, size = 0x2000, scoped, tag = 'output window, operand 0, single buffered']
    %8 = vsyncpa [#allocation3], 0
    %9 = vsyncpa [#allocation4], 0
    // Predicated region
    $region2: #{tpu_custom_call.1} parent=1 // pred_check
      _
    $region3: #{tpu_custom_call.1} parent=1 // pred_check_branch
      %11 = sbr.rel (0) target = $region5
    $region4: #{tpu_custom_call.1} parent=1 // pred_region
      %s13 = ssub.s32 256, 256
      %14 = vsyncadd [#allocation3], %s13
      %s15 = sshll.u32 [#allocation2], 4
      %s16 = int_to_ptr.vmem [resolvable:$true] %s15
      %21 = dma.hbm_to_vmem [thread:$0]  %s0, 256, %s16, [#allocation3], 128, 128, 8
    $region5: #{tpu_custom_call.1} parent=1 // pred_fallthru
      _
    // Predicated region
    $region6: #{tpu_custom_call.1} parent=1 // pred_check
      _
    $region7: #{tpu_custom_call.1} parent=1 // pred_check_branch
      %23 = sbr.rel (0) target = $region9
    $region8: #{tpu_custom_call.1} parent=1 // pred_region
      _
    $region9: #{tpu_custom_call.1} parent=1 // pred_fallthru
      _
    // Predicated region
    $region10: #{tpu_custom_call.1} parent=1 // pred_check
      _
    $region11: #{tpu_custom_call.1} parent=1 // pred_check_branch
      %25 = sbr.rel (0) target = $region13
    $region12: #{tpu_custom_call.1} parent=1 // pred_region
      _
    $region13: #{tpu_custom_call.1} parent=1 // pred_fallthru
      _
    // Predicated region
    $region14: #{tpu_custom_call.1} parent=1 // pred_check
      _
    $region15: #{tpu_custom_call.1} parent=1 // pred_check_branch
      %27 = sbr.rel (0) target = $region17
    $region16: #{tpu_custom_call.1} parent=1 // pred_region
      %28 = dma.done [#allocation3], 256
    $region17: #{tpu_custom_call.1} parent=1 // pred_fallthru
      _
    %v29 = vld [vmem:[#allocation2] sm:$0xff]
    %v30 = vld [vmem:[#allocation2 + $0x8] sm:$0xff]
    %31 = vadd.xlane.f32.xlu0 %v29
    %v32 = vpop.xlane.xlu0 %31
    %33 = vadd.xlane.f32.xlu0 %v30
    %v34 = vpop.xlane.xlu0 %33
    %v35 = vmul.f32 %v32, 0.03125
    %v36 = vmul.f32 %v34, 0.03125
    %v37 = vmul.f32 %v29, %v29
    %v38 = vmul.f32 %v30, %v30
    %39 = vadd.xlane.f32.xlu0 %v37
    %v40 = vpop.xlane.xlu0 %39
    %41 = vadd.xlane.f32.xlu0 %v38
    %v42 = vpop.xlane.xlu0 %41
    %v43 = vmul.f32 %v40, 0.03125
    %v44 = vmul.f32 %v42, 0.03125
    %v45 = vmul.f32 %v35, %v35
    %v46 = vmul.f32 %v36, %v36
    %v47 = vsub.f32 %v43, %v45
    %v48 = vsub.f32 %v44, %v46
    %v49 = vmax.f32 %v47, 0.0
    %v50 = vmax.f32 %v48, 0.0
    %v51 = vadd.f32 %v49, 1e-12
    %v52 = vadd.f32 %v50, 1e-12
    %v53 = vrsqrt.pop %v51
    %v54 = vrsqrt.pop %v52
    %v55 = vld [vmem:[%s1] sm:$0x1]
    %v56 = vld [vmem:[%s2] sm:$0x1]
    %v57 = vsub.f32 %v29, %v35
    %v58 = vsub.f32 %v30, %v36
    %v59 = vmul.f32 %v57, %v53
    %v60 = vmul.f32 %v58, %v54
    %v62 = vlaneseq
    %v63 = vshrl.u32 %v62, 7
    %v64 = vsub.s32 0, %v63
    %v65 = vrot.slane %v55, %v64
    %v67 = vmul.f32 %v65, %v59
    %v68 = vmul.f32 %v65, %v60
    %v70 = vlaneseq
    %v71 = vshrl.u32 %v70, 7
    %v72 = vsub.s32 0, %v71
    %v73 = vrot.slane %v56, %v72
    %v75 = vadd.f32 %v67, %v73
    %v76 = vadd.f32 %v68, %v73
    %77 = vst [vmem:[#allocation5] sm:$0xff] %v75
    %78 = vst [vmem:[#allocation5 + $0x8] sm:$0xff] %v76
    // Predicated region
    $region18: #{tpu_custom_call.1} parent=1 // pred_check
      _
    $region19: #{tpu_custom_call.1} parent=1 // pred_check_branch
      %80 = sbr.rel (0) target = $region21
    $region20: #{tpu_custom_call.1} parent=1 // pred_region
      %s82 = ssub.s32 256, 256
      %83 = vsyncadd [#allocation4], %s82
      %s84 = sshll.u32 [#allocation5], 4
      %s85 = int_to_ptr.vmem [resolvable:$true] %s84
      %90 = dma.vmem_to_hbm [thread:$0]  %s85, 256, %s3, [#allocation4], 128, 128, 8
    $region21: #{tpu_custom_call.1} parent=1 // pred_fallthru
      _
    // Predicated region
    $region22: #{tpu_custom_call.1} parent=1 // pred_check
      _
    $region23: #{tpu_custom_call.1} parent=1 // pred_check_branch
      %92 = sbr.rel (0) target = $region25
    $region24: #{tpu_custom_call.1} parent=1 // pred_region
      %93 = dma.done [#allocation4], 256
    $region25: #{tpu_custom_call.1} parent=1 // pred_fallthru
      _
    %94 = vsyncpa [#allocation3], 1
    %95 = vsyncpa [#allocation4], 1

</llo_original>
